<compile_context>
chip_gen: v5e
topology: v5e:2x2
jax: 0.10.0
libtpu: 0.0.40
codegen_flags: <defaults>
</compile_context>

<pallas_src>
import functools

import jax
import jax.numpy as jnp
from jax.experimental import pallas as pl
from jax.experimental.pallas import tpu as pltpu

LANE = 128      # lane width (last dim)
SUB = 8         # f32 sublane width
SUB_BF16 = 16   # bf16 packs 2 rows per sublane


def _round_up(n, m):
    return ((n + m - 1) // m) * m


def _pad2(a, rows, cols, dtype=None):
    r, c = a.shape
    out = jnp.pad(a, ((0, rows - r), (0, cols - c)))
    return out.astype(dtype) if dtype is not None else out


def _full_spec(shape):
    # whole-array block, no grid
    return pl.BlockSpec(shape, lambda: (0,) * len(shape))


def _vmem_limit_bytes():
    # ~75% of physical per-core VMEM, capped at 100 MiB:
    #   v7x (64 MiB physical)  -> 48 MiB (leaves headroom for weights/scratch)
    #   v5e/v6e (128 MiB)      -> ~96-100 MiB (well above the 16/32 MiB scoped default)
    try:
        cap = pltpu.get_tpu_info().vmem_capacity_bytes
        return min(int(cap) * 3 // 4, 100 << 20)
    except Exception:
        return 48 << 20


# ------------------------------------------------------------ fused kernel ---
def _fused_mlp_kernel(num_nodes,
                      x_ref, adj_ref, pool_ref,
                      c1wl_ref, c1wr_ref, c1b_ref,
                      c2wl_ref, c2wr_ref, c2b_ref,
                      c3wl_ref, c3wr_ref, c3b_ref,
                      l1w_ref, l1b_ref, l2w_ref, l2b_ref,
                      l3w_ref, l3b_ref, l4w_ref, l4b_ref,
                      out_ref):
    n_pad = adj_ref.shape[0]

    # Mask for zero-padded (fake) node rows so they never pick up the SAGE bias.
    row_ids = jax.lax.broadcasted_iota(jnp.int32, (n_pad, 1), 0)
    row_mask = (row_ids < num_nodes).astype(jnp.bfloat16)

    def sage(h, wl_ref, wr_ref, b_ref):
        # Mean aggregation over incoming neighbors (adj is row-normalized).
        # adj is read from its VMEM tile per layer (not hoisted into vregs).
        agg = jnp.dot(adj_ref[...], h,
                      preferred_element_type=jnp.float32).astype(jnp.bfloat16)
        # PyG SAGEConv: lin_l (+bias) applied to aggregated neighbors, lin_r to root.
        y = (jnp.dot(agg, wl_ref[...], preferred_element_type=jnp.float32)
             + jnp.dot(h, wr_ref[...], preferred_element_type=jnp.float32)
             + b_ref[...])
        return y.astype(jnp.bfloat16) * row_mask

    h = x_ref[...]                                       # (Np, LANE) bf16
    h = sage(h, c1wl_ref, c1wr_ref, c1b_ref)
    h = sage(h, c2wl_ref, c2wr_ref, c2b_ref)
    h = sage(h, c3wl_ref, c3wr_ref, c3b_ref)

    # global_mean_pool (dropout in eval mode is identity)
    c = jnp.dot(pool_ref[...], h, preferred_element_type=jnp.float32)   # (Gp, LANE) f32

    def lin_tanh(v, w_ref, b_ref):
        # BatchNorm folded into w/b at trace time; f32 operands (negligible FLOPs);
        # tanh goes to the EUP.
        y = jnp.dot(v, w_ref[...], preferred_element_type=jnp.float32) + b_ref[...]
        return jnp.tanh(y)

    b = lin_tanh(c, l1w_ref, l1b_ref)
    b = lin_tanh(b, l2w_ref, l2b_ref)
    b = lin_tanh(b, l3w_ref, l3b_ref)

    # Final Linear in f32 (logit precision); output tile is lane-dense (128 lanes).
    out_ref[...] = (jnp.dot(b, l4w_ref[...], preferred_element_type=jnp.float32)
                    + l4b_ref[...])


# ------------------------------------------------------------ param helpers --
def _fold_bn(w, b, gamma, beta, mean, var, eps=1e-5):
    """Fold eval-mode BatchNorm1d into the preceding Linear (f32, trace time)."""
    scale = gamma * jax.lax.rsqrt(var + eps)              # (1, F)
    return w * scale, (b - mean) * scale + beta


def init_params(key, input_size, hidden, num_classes):
    h2 = input_size // 2
    sizes = dict(h2=h2, hid=hidden, hid2=hidden // 2, hid4=hidden // 4,
                 nc=num_classes)

    def lin_init(k, fan_in, fan_out):
        kw, kb = jax.random.split(k)
        bound = 1.0 / jnp.sqrt(fan_in)
        w = jax.random.uniform(kw, (fan_in, fan_out), jnp.float32, -bound, bound)
        b = jax.random.uniform(kb, (1, fan_out), jnp.float32, -bound, bound)
        return w, b

    ks = jax.random.split(key, 16)
    p = {}
    # SAGEConv layers (PyG): lin_l (with bias) acts on aggregated neighbors,
    # lin_r (no bias) on root features; weights stored (in, out).
    p["c1_wl"], p["c1_b"] = lin_init(ks[0], input_size, h2)
    p["c1_wr"], _ = lin_init(ks[1], input_size, h2)
    p["c2_wl"], p["c2_b"] = lin_init(ks[2], h2, h2)
    p["c2_wr"], _ = lin_init(ks[3], h2, h2)
    p["c3_wl"], p["c3_b"] = lin_init(ks[4], h2, h2)
    p["c3_wr"], _ = lin_init(ks[5], h2, h2)
    # MLP head
    p["l1_w"], p["l1_b"] = lin_init(ks[6], h2, hidden)
    p["l2_w"], p["l2_b"] = lin_init(ks[7], hidden, hidden // 2)
    p["l3_w"], p["l3_b"] = lin_init(ks[8], hidden // 2, hidden // 4)
    p["l4_w"], p["l4_b"] = lin_init(ks[9], hidden // 4, num_classes)
    # BatchNorm1d (eval-mode running statistics, default init)
    for name, dim in (("bn1", hidden), ("bn2", hidden // 2), ("bn3", hidden // 4)):
        p[f"{name}_gamma"] = jnp.ones((1, dim), jnp.float32)
        p[f"{name}_beta"] = jnp.zeros((1, dim), jnp.float32)
        p[f"{name}_mean"] = jnp.zeros((1, dim), jnp.float32)
        p[f"{name}_var"] = jnp.ones((1, dim), jnp.float32)
    return p, sizes


def build_adjacency(edge_index, num_nodes):
    """Row-normalized dense adjacency (dst aggregates src), built once in kernel dtype."""
    src, dst = edge_index[0], edge_index[1]
    adj = jnp.zeros((num_nodes, num_nodes), jnp.float32).at[dst, src].add(1.0)
    deg = adj.sum(axis=1, keepdims=True)
    return (adj / jnp.maximum(deg, 1.0)).astype(jnp.bfloat16)


def build_pool_matrix(batch, num_graphs):
    """(G, N) matrix s.t. pool_mat @ x == per-graph mean of node features (kernel dtype)."""
    onehot = (batch[None, :] == jnp.arange(num_graphs)[:, None]).astype(jnp.float32)
    counts = onehot.sum(axis=1, keepdims=True)
    return (onehot / jnp.maximum(counts, 1.0)).astype(jnp.bfloat16)


# ------------------------------------------------------------------ forward --
@jax.jit
def mlp_forward(params, x, adj, pool_mat):
    n, f_in = x.shape
    g = pool_mat.shape[0]
    h2 = params["c1_wl"].shape[1]
    hidden = params["l1_w"].shape[1]
    num_classes = params["l4_w"].shape[1]

    # single-tile padding strategy: all feature dims must fit one lane tile
    assert max(f_in, h2, hidden, num_classes) <= LANE, \
        "feature dims > 128 need a tiled grid"  # TODO(synk): grid-tile for large features

    # Minimal row padding (bf16 sublane pair); full-array blocks exempt the (8,128) rule.
    n_pad = _round_up(n, SUB_BF16)
    g_pad = _round_up(g, SUB)

    # ---- pad activations / graph structure (zero padding is semantically inert) ----
    x_p = _pad2(x, n_pad, LANE, jnp.bfloat16)
    adj_p = _pad2(adj, n_pad, n_pad, jnp.bfloat16)
    pool_p = _pad2(pool_mat, g_pad, n_pad, jnp.bfloat16)

    # ---- SAGE weights in bf16 (MXU-native), biases in f32 ----
    def sage_params(wl, wr, b):
        return (_pad2(wl, LANE, LANE, jnp.bfloat16),
                _pad2(wr, LANE, LANE, jnp.bfloat16),
                _pad2(b, 1, LANE, jnp.float32))

    c1wl, c1wr, c1b = sage_params(params["c1_wl"], params["c1_wr"], params["c1_b"])
    c2wl, c2wr, c2b = sage_params(params["c2_wl"], params["c2_wr"], params["c2_b"])
    c3wl, c3wr, c3b = sage_params(params["c3_wl"], params["c3_wr"], params["c3_b"])

    # ---- fold BN into the head Linears (kept f32: tiny FLOPs, logit precision) ----
    def fold_pad(w, b, bn):
        wf, bf = _fold_bn(w, b, params[f"{bn}_gamma"], params[f"{bn}_beta"],
                          params[f"{bn}_mean"], params[f"{bn}_var"])
        return _pad2(wf, LANE, LANE, jnp.float32), _pad2(bf, 1, LANE, jnp.float32)

    l1w, l1b = fold_pad(params["l1_w"], params["l1_b"], "bn1")
    l2w, l2b = fold_pad(params["l2_w"], params["l2_b"], "bn2")
    l3w, l3b = fold_pad(params["l3_w"], params["l3_b"], "bn3")
    l4w = _pad2(params["l4_w"], LANE, LANE, jnp.float32)
    l4b = _pad2(params["l4_b"], 1, LANE, jnp.float32)

    inputs = (x_p, adj_p, pool_p,
              c1wl, c1wr, c1b, c2wl, c2wr, c2b, c3wl, c3wr, c3b,
              l1w, l1b, l2w, l2b, l3w, l3b, l4w, l4b)

    # advisory cost hint for the XLA scheduler
    flops = (3 * (2 * n_pad * n_pad * LANE + 2 * 2 * n_pad * LANE * LANE)
             + 2 * g_pad * n_pad * LANE
             + 4 * 2 * g_pad * LANE * LANE)
    bytes_accessed = (sum(int(a.size) * a.dtype.itemsize for a in inputs)
                      + g_pad * LANE * 4)
    cost = pl.CostEstimate(flops=int(flops),
                           transcendentals=int(3 * g_pad * LANE),
                           bytes_accessed=int(bytes_accessed))

    out_pad = pl.pallas_call(
        functools.partial(_fused_mlp_kernel, n),
        out_shape=jax.ShapeDtypeStruct((g_pad, LANE), jnp.float32),
        in_specs=[_full_spec(a.shape) for a in inputs],
        out_specs=_full_spec((g_pad, LANE)),
        cost_estimate=cost,
        compiler_params=pltpu.CompilerParams(vmem_limit_bytes=_vmem_limit_bytes()),
    )(*inputs)

    # strip lane/sublane padding
    return out_pad[:g, :num_classes]


if __name__ == "__main__":
    key = jax.random.PRNGKey(0)
    k_param, k_x = jax.random.split(key)

    # Small synthetic graph batch: 12 nodes, 2 graphs, input_size=32, hidden=32, 4 classes.
    input_size, hidden, num_classes = 32, 32, 4
    num_nodes, num_graphs = 12, 2

    params, _ = init_params(k_param, input_size, hidden, num_classes)

    x = jax.random.normal(k_x, (num_nodes, input_size), jnp.float32)
    # edge_index: [2, E] (src row, dst row) — a ring within each graph of 6 nodes
    src = jnp.array([0, 1, 2, 3, 4, 5, 6, 7, 8, 9, 10, 11], jnp.int32)
    dst = jnp.array([1, 2, 3, 4, 5, 0, 7, 8, 9, 10, 11, 6], jnp.int32)
    edge_index = jnp.stack([src, dst], axis=0)
    batch = jnp.array([0, 0, 0, 0, 0, 0, 1, 1, 1, 1, 1, 1], jnp.int32)

    adj = build_adjacency(edge_index, num_nodes)          # built once, bf16
    pool_mat = build_pool_matrix(batch, num_graphs)       # built once, bf16

    out = mlp_forward(params, x, adj, pool_mat)
    jax.block_until_ready(out)
    assert out.shape == (num_graphs, num_classes)
    assert bool(jnp.all(jnp.isfinite(out)))
    print("KERNEL_OK")
</pallas_src>

<mosaic_0001>
module attributes {stable_mosaic.version = 11 : i64} {
  func.func @_fused_mlp_kernel(%arg0: memref<16x128xbf16, #tpu.memory_space<vmem>>, %arg1: memref<16x16xbf16, #tpu.memory_space<vmem>>, %arg2: memref<8x16xbf16, #tpu.memory_space<vmem>>, %arg3: memref<128x128xbf16, #tpu.memory_space<vmem>>, %arg4: memref<128x128xbf16, #tpu.memory_space<vmem>>, %arg5: memref<1x128xf32, #tpu.memory_space<vmem>>, %arg6: memref<128x128xbf16, #tpu.memory_space<vmem>>, %arg7: memref<128x128xbf16, #tpu.memory_space<vmem>>, %arg8: memref<1x128xf32, #tpu.memory_space<vmem>>, %arg9: memref<128x128xbf16, #tpu.memory_space<vmem>>, %arg10: memref<128x128xbf16, #tpu.memory_space<vmem>>, %arg11: memref<1x128xf32, #tpu.memory_space<vmem>>, %arg12: memref<128x128xf32, #tpu.memory_space<vmem>>, %arg13: memref<1x128xf32, #tpu.memory_space<vmem>>, %arg14: memref<128x128xf32, #tpu.memory_space<vmem>>, %arg15: memref<1x128xf32, #tpu.memory_space<vmem>>, %arg16: memref<128x128xf32, #tpu.memory_space<vmem>>, %arg17: memref<1x128xf32, #tpu.memory_space<vmem>>, %arg18: memref<128x128xf32, #tpu.memory_space<vmem>>, %arg19: memref<1x128xf32, #tpu.memory_space<vmem>>, %arg20: memref<8x128xf32, #tpu.memory_space<vmem>>) attributes {dimension_semantics = [], scalar_prefetch = 0 : i64, scratch_operands = 0 : i64, tpu.core_type = #tpu.core_type<tc>} {
    %0 = tpu.iota {dimensions = array<i32: 0>} : vector<16x1xi32>
    %c12_i32 = arith.constant 12 : i32
    %1 = vector.broadcast %c12_i32 : i32 to vector<16x1xi32>
    %2 = arith.cmpi slt, %0, %1 : vector<16x1xi32>
    %3 = arith.extui %2 : vector<16x1xi1> to vector<16x1xi32>
    %4 = arith.sitofp %3 : vector<16x1xi32> to vector<16x1xf32>
    %5 = arith.truncf %4 : vector<16x1xf32> to vector<16x1xbf16>
    %c0 = arith.constant 0 : index
    %c0_0 = arith.constant 0 : index
    %6 = vector.load %arg0[%c0, %c0_0] : memref<16x128xbf16, #tpu.memory_space<vmem>>, vector<16x128xbf16>
    %c0_1 = arith.constant 0 : index
    %c0_2 = arith.constant 0 : index
    %7 = vector.load %arg1[%c0_1, %c0_2] : memref<16x16xbf16, #tpu.memory_space<vmem>>, vector<16x16xbf16>
    %cst = arith.constant dense<0.000000e+00> : vector<16x128xf32>
    %8 = tpu.matmul %7, %6, %cst {dimension_numbers = #tpu.dot_dimension_numbers<[1], [0], [0], [1], [0, 0, 1, 1], [], []>} : vector<16x16xbf16>, vector<16x128xbf16>, vector<16x128xf32> -> vector<16x128xf32>
    %9 = arith.truncf %8 : vector<16x128xf32> to vector<16x128xbf16>
    %c0_3 = arith.constant 0 : index
    %c0_4 = arith.constant 0 : index
    %10 = vector.load %arg3[%c0_3, %c0_4] : memref<128x128xbf16, #tpu.memory_space<vmem>>, vector<128x128xbf16>
    %cst_5 = arith.constant dense<0.000000e+00> : vector<16x128xf32>
    %11 = tpu.matmul %9, %10, %cst_5 {dimension_numbers = #tpu.dot_dimension_numbers<[1], [0], [0], [1], [0, 0, 1, 1], [], []>} : vector<16x128xbf16>, vector<128x128xbf16>, vector<16x128xf32> -> vector<16x128xf32>
    %c0_6 = arith.constant 0 : index
    %c0_7 = arith.constant 0 : index
    %12 = vector.load %arg4[%c0_6, %c0_7] : memref<128x128xbf16, #tpu.memory_space<vmem>>, vector<128x128xbf16>
    %cst_8 = arith.constant dense<0.000000e+00> : vector<16x128xf32>
    %13 = tpu.matmul %6, %12, %cst_8 {dimension_numbers = #tpu.dot_dimension_numbers<[1], [0], [0], [1], [0, 0, 1, 1], [], []>} : vector<16x128xbf16>, vector<128x128xbf16>, vector<16x128xf32> -> vector<16x128xf32>
    %14 = arith.addf %11, %13 : vector<16x128xf32>
    %c0_9 = arith.constant 0 : index
    %c0_10 = arith.constant 0 : index
    %15 = vector.load %arg5[%c0_9, %c0_10] : memref<1x128xf32, #tpu.memory_space<vmem>>, vector<1x128xf32>
    %16 = vector.broadcast %15 : vector<1x128xf32> to vector<16x128xf32>
    %17 = arith.addf %14, %16 : vector<16x128xf32>
    %18 = arith.truncf %17 : vector<16x128xf32> to vector<16x128xbf16>
    %19 = vector.broadcast %5 : vector<16x1xbf16> to vector<16x128xbf16>
    %20 = arith.mulf %18, %19 : vector<16x128xbf16>
    %c0_11 = arith.constant 0 : index
    %c0_12 = arith.constant 0 : index
    %21 = vector.load %arg1[%c0_11, %c0_12] : memref<16x16xbf16, #tpu.memory_space<vmem>>, vector<16x16xbf16>
    %cst_13 = arith.constant dense<0.000000e+00> : vector<16x128xf32>
    %22 = tpu.matmul %21, %20, %cst_13 {dimension_numbers = #tpu.dot_dimension_numbers<[1], [0], [0], [1], [0, 0, 1, 1], [], []>} : vector<16x16xbf16>, vector<16x128xbf16>, vector<16x128xf32> -> vector<16x128xf32>
    %23 = arith.truncf %22 : vector<16x128xf32> to vector<16x128xbf16>
    %c0_14 = arith.constant 0 : index
    %c0_15 = arith.constant 0 : index
    %24 = vector.load %arg6[%c0_14, %c0_15] : memref<128x128xbf16, #tpu.memory_space<vmem>>, vector<128x128xbf16>
    %cst_16 = arith.constant dense<0.000000e+00> : vector<16x128xf32>
    %25 = tpu.matmul %23, %24, %cst_16 {dimension_numbers = #tpu.dot_dimension_numbers<[1], [0], [0], [1], [0, 0, 1, 1], [], []>} : vector<16x128xbf16>, vector<128x128xbf16>, vector<16x128xf32> -> vector<16x128xf32>
    %c0_17 = arith.constant 0 : index
    %c0_18 = arith.constant 0 : index
    %26 = vector.load %arg7[%c0_17, %c0_18] : memref<128x128xbf16, #tpu.memory_space<vmem>>, vector<128x128xbf16>
    %cst_19 = arith.constant dense<0.000000e+00> : vector<16x128xf32>
    %27 = tpu.matmul %20, %26, %cst_19 {dimension_numbers = #tpu.dot_dimension_numbers<[1], [0], [0], [1], [0, 0, 1, 1], [], []>} : vector<16x128xbf16>, vector<128x128xbf16>, vector<16x128xf32> -> vector<16x128xf32>
    %28 = arith.addf %25, %27 : vector<16x128xf32>
    %c0_20 = arith.constant 0 : index
    %c0_21 = arith.constant 0 : index
    %29 = vector.load %arg8[%c0_20, %c0_21] : memref<1x128xf32, #tpu.memory_space<vmem>>, vector<1x128xf32>
    %30 = vector.broadcast %29 : vector<1x128xf32> to vector<16x128xf32>
    %31 = arith.addf %28, %30 : vector<16x128xf32>
    %32 = arith.truncf %31 : vector<16x128xf32> to vector<16x128xbf16>
    %33 = vector.broadcast %5 : vector<16x1xbf16> to vector<16x128xbf16>
    %34 = arith.mulf %32, %33 : vector<16x128xbf16>
    %c0_22 = arith.constant 0 : index
    %c0_23 = arith.constant 0 : index
    %35 = vector.load %arg1[%c0_22, %c0_23] : memref<16x16xbf16, #tpu.memory_space<vmem>>, vector<16x16xbf16>
    %cst_24 = arith.constant dense<0.000000e+00> : vector<16x128xf32>
    %36 = tpu.matmul %35, %34, %cst_24 {dimension_numbers = #tpu.dot_dimension_numbers<[1], [0], [0], [1], [0, 0, 1, 1], [], []>} : vector<16x16xbf16>, vector<16x128xbf16>, vector<16x128xf32> -> vector<16x128xf32>
    %37 = arith.truncf %36 : vector<16x128xf32> to vector<16x128xbf16>
    %c0_25 = arith.constant 0 : index
    %c0_26 = arith.constant 0 : index
    %38 = vector.load %arg9[%c0_25, %c0_26] : memref<128x128xbf16, #tpu.memory_space<vmem>>, vector<128x128xbf16>
    %cst_27 = arith.constant dense<0.000000e+00> : vector<16x128xf32>
    %39 = tpu.matmul %37, %38, %cst_27 {dimension_numbers = #tpu.dot_dimension_numbers<[1], [0], [0], [1], [0, 0, 1, 1], [], []>} : vector<16x128xbf16>, vector<128x128xbf16>, vector<16x128xf32> -> vector<16x128xf32>
    %c0_28 = arith.constant 0 : index
    %c0_29 = arith.constant 0 : index
    %40 = vector.load %arg10[%c0_28, %c0_29] : memref<128x128xbf16, #tpu.memory_space<vmem>>, vector<128x128xbf16>
    %cst_30 = arith.constant dense<0.000000e+00> : vector<16x128xf32>
    %41 = tpu.matmul %34, %40, %cst_30 {dimension_numbers = #tpu.dot_dimension_numbers<[1], [0], [0], [1], [0, 0, 1, 1], [], []>} : vector<16x128xbf16>, vector<128x128xbf16>, vector<16x128xf32> -> vector<16x128xf32>
    %42 = arith.addf %39, %41 : vector<16x128xf32>
    %c0_31 = arith.constant 0 : index
    %c0_32 = arith.constant 0 : index
    %43 = vector.load %arg11[%c0_31, %c0_32] : memref<1x128xf32, #tpu.memory_space<vmem>>, vector<1x128xf32>
    %44 = vector.broadcast %43 : vector<1x128xf32> to vector<16x128xf32>
    %45 = arith.addf %42, %44 : vector<16x128xf32>
    %46 = arith.truncf %45 : vector<16x128xf32> to vector<16x128xbf16>
    %47 = vector.broadcast %5 : vector<16x1xbf16> to vector<16x128xbf16>
    %48 = arith.mulf %46, %47 : vector<16x128xbf16>
    %c0_33 = arith.constant 0 : index
    %c0_34 = arith.constant 0 : index
    %49 = vector.load %arg2[%c0_33, %c0_34] : memref<8x16xbf16, #tpu.memory_space<vmem>>, vector<8x16xbf16>
    %cst_35 = arith.constant dense<0.000000e+00> : vector<8x128xf32>
    %50 = tpu.matmul %49, %48, %cst_35 {dimension_numbers = #tpu.dot_dimension_numbers<[1], [0], [0], [1], [0, 0, 1, 1], [], []>} : vector<8x16xbf16>, vector<16x128xbf16>, vector<8x128xf32> -> vector<8x128xf32>
    %c0_36 = arith.constant 0 : index
    %c0_37 = arith.constant 0 : index
    %51 = vector.load %arg12[%c0_36, %c0_37] : memref<128x128xf32, #tpu.memory_space<vmem>>, vector<128x128xf32>
    %cst_38 = arith.constant dense<0.000000e+00> : vector<8x128xf32>
    %52 = tpu.matmul %50, %51, %cst_38 {dimension_numbers = #tpu.dot_dimension_numbers<[1], [0], [0], [1], [0, 0, 1, 1], [], []>} : vector<8x128xf32>, vector<128x128xf32>, vector<8x128xf32> -> vector<8x128xf32>
    %c0_39 = arith.constant 0 : index
    %c0_40 = arith.constant 0 : index
    %53 = vector.load %arg13[%c0_39, %c0_40] : memref<1x128xf32, #tpu.memory_space<vmem>>, vector<1x128xf32>
    %54 = vector.broadcast %53 : vector<1x128xf32> to vector<8x128xf32>
    %55 = arith.addf %52, %54 : vector<8x128xf32>
    %56 = math.tanh %55 : vector<8x128xf32>
    %c0_41 = arith.constant 0 : index
    %c0_42 = arith.constant 0 : index
    %57 = vector.load %arg14[%c0_41, %c0_42] : memref<128x128xf32, #tpu.memory_space<vmem>>, vector<128x128xf32>
    %cst_43 = arith.constant dense<0.000000e+00> : vector<8x128xf32>
    %58 = tpu.matmul %56, %57, %cst_43 {dimension_numbers = #tpu.dot_dimension_numbers<[1], [0], [0], [1], [0, 0, 1, 1], [], []>} : vector<8x128xf32>, vector<128x128xf32>, vector<8x128xf32> -> vector<8x128xf32>
    %c0_44 = arith.constant 0 : index
    %c0_45 = arith.constant 0 : index
    %59 = vector.load %arg15[%c0_44, %c0_45] : memref<1x128xf32, #tpu.memory_space<vmem>>, vector<1x128xf32>
    %60 = vector.broadcast %59 : vector<1x128xf32> to vector<8x128xf32>
    %61 = arith.addf %58, %60 : vector<8x128xf32>
    %62 = math.tanh %61 : vector<8x128xf32>
    %c0_46 = arith.constant 0 : index
    %c0_47 = arith.constant 0 : index
    %63 = vector.load %arg16[%c0_46, %c0_47] : memref<128x128xf32, #tpu.memory_space<vmem>>, vector<128x128xf32>
    %cst_48 = arith.constant dense<0.000000e+00> : vector<8x128xf32>
    %64 = tpu.matmul %62, %63, %cst_48 {dimension_numbers = #tpu.dot_dimension_numbers<[1], [0], [0], [1], [0, 0, 1, 1], [], []>} : vector<8x128xf32>, vector<128x128xf32>, vector<8x128xf32> -> vector<8x128xf32>
    %c0_49 = arith.constant 0 : index
    %c0_50 = arith.constant 0 : index
    %65 = vector.load %arg17[%c0_49, %c0_50] : memref<1x128xf32, #tpu.memory_space<vmem>>, vector<1x128xf32>
    %66 = vector.broadcast %65 : vector<1x128xf32> to vector<8x128xf32>
    %67 = arith.addf %64, %66 : vector<8x128xf32>
    %68 = math.tanh %67 : vector<8x128xf32>
    %c0_51 = arith.constant 0 : index
    %c0_52 = arith.constant 0 : index
    %69 = vector.load %arg18[%c0_51, %c0_52] : memref<128x128xf32, #tpu.memory_space<vmem>>, vector<128x128xf32>
    %cst_53 = arith.constant dense<0.000000e+00> : vector<8x128xf32>
    %70 = tpu.matmul %68, %69, %cst_53 {dimension_numbers = #tpu.dot_dimension_numbers<[1], [0], [0], [1], [0, 0, 1, 1], [], []>} : vector<8x128xf32>, vector<128x128xf32>, vector<8x128xf32> -> vector<8x128xf32>
    %c0_54 = arith.constant 0 : index
    %c0_55 = arith.constant 0 : index
    %71 = vector.load %arg19[%c0_54, %c0_55] : memref<1x128xf32, #tpu.memory_space<vmem>>, vector<1x128xf32>
    %72 = vector.broadcast %71 : vector<1x128xf32> to vector<8x128xf32>
    %73 = arith.addf %70, %72 : vector<8x128xf32>
    %c0_56 = arith.constant 0 : index
    %c0_57 = arith.constant 0 : index
    %74 = vector.load %arg20[%c0_56, %c0_57] : memref<8x128xf32, #tpu.memory_space<vmem>>, vector<8x128xf32>
    tpu.vector_store %arg20[%c0_56, %c0_57], %73 {strides = array<i32>} : memref<8x128xf32, #tpu.memory_space<vmem>>, vector<8x128xf32>,
    return
  }
}

</mosaic_0001>

<llo_original>
// kernel: mlp_forward.1
$region0: #{mlp_forward.1}
  #allocation0 [shape = 'u32[]', space=smem, size = 0x4, offset = 0x4, fixed_abs, tag = 'smem constant byte address 0x4 - core index']
  #allocation1 [shape = 'u32[72,128]{1,0:T(1,128)}', space=vmem, size = 0x9000, scoped, tag = 'internal scratch']
  %s0 = inlined_call_operand.vmem [shape: bf16[16,128], index: 0, kind: input, shape index: {}]
  %s1 = inlined_call_operand.vmem [shape: bf16[16,16], index: 1, kind: input, shape index: {}]
  %s2 = inlined_call_operand.vmem [shape: bf16[8,16], index: 2, kind: input, shape index: {}]
  %s3 = inlined_call_operand.vmem [shape: bf16[128,128], index: 3, kind: input, shape index: {}]
  %s4 = inlined_call_operand.vmem [shape: bf16[128,128], index: 4, kind: input, shape index: {}]
  %s5 = inlined_call_operand.vmem [shape: f32[1,128], index: 5, kind: input, shape index: {}]
  %s6 = inlined_call_operand.vmem [shape: bf16[128,128], index: 6, kind: input, shape index: {}]
  %s7 = inlined_call_operand.vmem [shape: bf16[128,128], index: 7, kind: input, shape index: {}]
  %s8 = inlined_call_operand.vmem [shape: f32[1,128], index: 8, kind: input, shape index: {}]
  %s9 = inlined_call_operand.vmem [shape: bf16[128,128], index: 9, kind: input, shape index: {}]
  %s10 = inlined_call_operand.vmem [shape: bf16[128,128], index: 10, kind: input, shape index: {}]
  %s11 = inlined_call_operand.vmem [shape: f32[1,128], index: 11, kind: input, shape index: {}]
  %s12 = inlined_call_operand.vmem [shape: f32[128,128], index: 12, kind: input, shape index: {}]
  %s13 = inlined_call_operand.vmem [shape: f32[1,128], index: 13, kind: input, shape index: {}]
  %s14 = inlined_call_operand.vmem [shape: f32[128,128], index: 14, kind: input, shape index: {}]
  %s15 = inlined_call_operand.vmem [shape: f32[1,128], index: 15, kind: input, shape index: {}]
  %s16 = inlined_call_operand.vmem [shape: f32[128,128], index: 16, kind: input, shape index: {}]
  %s17 = inlined_call_operand.vmem [shape: f32[1,128], index: 17, kind: input, shape index: {}]
  %s18 = inlined_call_operand.vmem [shape: f32[128,128], index: 18, kind: input, shape index: {}]
  %s19 = inlined_call_operand.vmem [shape: f32[1,128], index: 19, kind: input, shape index: {}]
  %s20 = inlined_call_operand.vmem [shape: f32[8,128], index: 20, kind: output, shape index: {}]
  %s21 = sld [smem:[#allocation0]]
  $region90: #{mlp_forward.1} parent=0
    _
  %s23 = ssub.s32 1, %s21
  %s24 = scalar_select 0, %s23, %s21
  // Predicated region
  $region2: #{mlp_forward.1} parent=0 // pred_check
    _
  $region3: #{mlp_forward.1} parent=0 // pred_check_branch
    %26 = sbr.rel (0) target = $region5
  $region4: #{mlp_forward.1} parent=0 // pred_region
    _
  $region5: #{mlp_forward.1} parent=0 // pred_fallthru
    _
  // Predicated region
  $region6: #{mlp_forward.1} parent=0 // pred_check
    _
  $region7: #{mlp_forward.1} parent=0 // pred_check_branch
    %28 = sbr.rel (0) target = $region9
  $region8: #{mlp_forward.1} parent=0 // pred_region
    _
  $region9: #{mlp_forward.1} parent=0 // pred_fallthru
    _
  // Predicated region
  $region10: #{mlp_forward.1} parent=0 // pred_check
    _
  $region11: #{mlp_forward.1} parent=0 // pred_check_branch
    %30 = sbr.rel (0) target = $region13
  $region12: #{mlp_forward.1} parent=0 // pred_region
    _
  $region13: #{mlp_forward.1} parent=0 // pred_fallthru
    _
  // Predicated region
  $region14: #{mlp_forward.1} parent=0 // pred_check
    _
  $region15: #{mlp_forward.1} parent=0 // pred_check_branch
    %32 = sbr.rel (0) target = $region17
  $region16: #{mlp_forward.1} parent=0 // pred_region
    _
  $region17: #{mlp_forward.1} parent=0 // pred_fallthru
    _
  // Predicated region
  $region18: #{mlp_forward.1} parent=0 // pred_check
    _
  $region19: #{mlp_forward.1} parent=0 // pred_check_branch
    %34 = sbr.rel (0) target = $region21
  $region20: #{mlp_forward.1} parent=0 // pred_region
    _
  $region21: #{mlp_forward.1} parent=0 // pred_fallthru
    _
  // Predicated region
  $region22: #{mlp_forward.1} parent=0 // pred_check
    _
  $region23: #{mlp_forward.1} parent=0 // pred_check_branch
    %36 = sbr.rel (0) target = $region25
  $region24: #{mlp_forward.1} parent=0 // pred_region
    _
  $region25: #{mlp_forward.1} parent=0 // pred_fallthru
    _
  // Predicated region
  $region26: #{mlp_forward.1} parent=0 // pred_check
    _
  $region27: #{mlp_forward.1} parent=0 // pred_check_branch
    %38 = sbr.rel (0) target = $region29
  $region28: #{mlp_forward.1} parent=0 // pred_region
    _
  $region29: #{mlp_forward.1} parent=0 // pred_fallthru
    _
  // Predicated region
  $region30: #{mlp_forward.1} parent=0 // pred_check
    _
  $region31: #{mlp_forward.1} parent=0 // pred_check_branch
    %40 = sbr.rel (0) target = $region33
  $region32: #{mlp_forward.1} parent=0 // pred_region
    _
  $region33: #{mlp_forward.1} parent=0 // pred_fallthru
    _
  // Predicated region
  $region34: #{mlp_forward.1} parent=0 // pred_check
    _
  $region35: #{mlp_forward.1} parent=0 // pred_check_branch
    %42 = sbr.rel (0) target = $region37
  $region36: #{mlp_forward.1} parent=0 // pred_region
    _
  $region37: #{mlp_forward.1} parent=0 // pred_fallthru
    _
  // Predicated region
  $region38: #{mlp_forward.1} parent=0 // pred_check
    _
  $region39: #{mlp_forward.1} parent=0 // pred_check_branch
    %44 = sbr.rel (0) target = $region41
  $region40: #{mlp_forward.1} parent=0 // pred_region
    _
  $region41: #{mlp_forward.1} parent=0 // pred_fallthru
    _
  // Predicated region
  $region42: #{mlp_forward.1} parent=0 // pred_check
    _
  $region43: #{mlp_forward.1} parent=0 // pred_check_branch
    %46 = sbr.rel (0) target = $region45
  $region44: #{mlp_forward.1} parent=0 // pred_region
    _
  $region45: #{mlp_forward.1} parent=0 // pred_fallthru
    _
  // Predicated region
  $region46: #{mlp_forward.1} parent=0 // pred_check
    _
  $region47: #{mlp_forward.1} parent=0 // pred_check_branch
    %48 = sbr.rel (0) target = $region49
  $region48: #{mlp_forward.1} parent=0 // pred_region
    _
  $region49: #{mlp_forward.1} parent=0 // pred_fallthru
    _
  // Predicated region
  $region50: #{mlp_forward.1} parent=0 // pred_check
    _
  $region51: #{mlp_forward.1} parent=0 // pred_check_branch
    %50 = sbr.rel (0) target = $region53
  $region52: #{mlp_forward.1} parent=0 // pred_region
    _
  $region53: #{mlp_forward.1} parent=0 // pred_fallthru
    _
  // Predicated region
  $region54: #{mlp_forward.1} parent=0 // pred_check
    _
  $region55: #{mlp_forward.1} parent=0 // pred_check_branch
    %52 = sbr.rel (0) target = $region57
  $region56: #{mlp_forward.1} parent=0 // pred_region
    _
  $region57: #{mlp_forward.1} parent=0 // pred_fallthru
    _
  // Predicated region
  $region58: #{mlp_forward.1} parent=0 // pred_check
    _
  $region59: #{mlp_forward.1} parent=0 // pred_check_branch
    %54 = sbr.rel (0) target = $region61
  $region60: #{mlp_forward.1} parent=0 // pred_region
    _
  $region61: #{mlp_forward.1} parent=0 // pred_fallthru
    _
  // Predicated region
  $region62: #{mlp_forward.1} parent=0 // pred_check
    _
  $region63: #{mlp_forward.1} parent=0 // pred_check_branch
    %56 = sbr.rel (0) target = $region65
  $region64: #{mlp_forward.1} parent=0 // pred_region
    _
  $region65: #{mlp_forward.1} parent=0 // pred_fallthru
    _
  // Predicated region
  $region66: #{mlp_forward.1} parent=0 // pred_check
    _
  $region67: #{mlp_forward.1} parent=0 // pred_check_branch
    %58 = sbr.rel (0) target = $region69
  $region68: #{mlp_forward.1} parent=0 // pred_region
    _
  $region69: #{mlp_forward.1} parent=0 // pred_fallthru
    _
  // Predicated region
  $region70: #{mlp_forward.1} parent=0 // pred_check
    _
  $region71: #{mlp_forward.1} parent=0 // pred_check_branch
    %60 = sbr.rel (0) target = $region73
  $region72: #{mlp_forward.1} parent=0 // pred_region
    _
  $region73: #{mlp_forward.1} parent=0 // pred_fallthru
    _
  // Predicated region
  $region74: #{mlp_forward.1} parent=0 // pred_check
    _
  $region75: #{mlp_forward.1} parent=0 // pred_check_branch
    %62 = sbr.rel (0) target = $region77
  $region76: #{mlp_forward.1} parent=0 // pred_region
    _
  $region77: #{mlp_forward.1} parent=0 // pred_fallthru
    _
  // Predicated region
  $region78: #{mlp_forward.1} parent=0 // pred_check
    _
  $region79: #{mlp_forward.1} parent=0 // pred_check_branch
    %64 = sbr.rel (0) target = $region81
  $region80: #{mlp_forward.1} parent=0 // pred_region
    _
  $region81: #{mlp_forward.1} parent=0 // pred_fallthru
    _
  %v66 = vlaneseq
  %v67 = vshrl.u32 %v66, 7
  %v68 = vadd.s32 %v67, 8
  %vm69 = vcmp.lt.s32.totalorder %v67, 12
  %vm70 = vcmp.lt.s32.totalorder %v68, 12
  %v71 = vsel %vm69, 1, 0
  %v72 = vsel %vm70, 1, 0
  %v73 = vcvt.s32.f32 %v71
  %v74 = vcvt.s32.f32 %v72
  %v75 = vpack.c.bf16 %v73, %v73
  %v76 = vpack.c.bf16 %v74, %v74
  %v77 = vld [vmem:[%s0] sm:$0xf]
  %v78 = vld [vmem:[%s0 + $0x4] sm:$0xf]
  %v79 = vld [vmem:[%s1] sm:$0xf]
  %v80 = vld [vmem:[%s1 + $0x4] sm:$0xf]
  %v83 = vunpack.c.l.b16 %v79
  %v84 = vunpack.c.l.b16 %v80
  %v85 = vpack.c.b16 %v84, %v83
  %v88 = vunpack.c.l.b16 %v77
  %v89 = vunpack.c.l.b16 %v78
  %v90 = vpack.c.b16 %v89, %v88
  %vm92 = vcmask 130048
  %v94 = vsel %vm92, %v85, 0
  %96 = vmatpush.bf16.msra.mxu0 0
  %97 = vmatpush.bf16.msra.mxu0 0
  %98 = vmatpush.bf16.msra.mxu0 0
  %99 = vmatpush.bf16.msra.mxu0 0
  %100 = vmatpush.bf16.msra.mxu0 0
  %101 = vmatpush.bf16.msra.mxu0 0
  %102 = vmatpush.bf16.msra.mxu0 0
  %103 = vmatpush.bf16.msra.mxu0 %v90
  %104 = vmatmul.bf16.gmra.mxu0 %v94
  %v105 = vpop.f32.mrf.mxu0
  %v106 = vadd.f32 0.0, %v105
  %v107 = vpop.f32.mrf.mxu0
  %v108 = vadd.f32 0.0, %v107
  %109 = vdwg.mxu0
  %v110 = vpack.c.bf16 %v108, %v106
  %v111 = vld [vmem:[%s3] sm:$0xf]
  %v112 = vld [vmem:[%s3 + $0x4] sm:$0xf]
  %v113 = vld [vmem:[%s3 + $0x8] sm:$0xf]
  %v114 = vld [vmem:[%s3 + $0xc] sm:$0xf]
  %v115 = vld [vmem:[%s3 + $0x10] sm:$0xf]
  %v116 = vld [vmem:[%s3 + $0x14] sm:$0xf]
  %v117 = vld [vmem:[%s3 + $0x18] sm:$0xf]
  %v118 = vld [vmem:[%s3 + $0x1c] sm:$0xf]
  %v119 = vld [vmem:[%s3 + $0x20] sm:$0xf]
  %v120 = vld [vmem:[%s3 + $0x24] sm:$0xf]
  %v121 = vld [vmem:[%s3 + $0x28] sm:$0xf]
  %v122 = vld [vmem:[%s3 + $0x2c] sm:$0xf]
  %v123 = vld [vmem:[%s3 + $0x30] sm:$0xf]
  %v124 = vld [vmem:[%s3 + $0x34] sm:$0xf]
  %v125 = vld [vmem:[%s3 + $0x38] sm:$0xf]
  %v126 = vld [vmem:[%s3 + $0x3c] sm:$0xf]
  %v127 = vld [vmem:[%s4] sm:$0xf]
  %v128 = vld [vmem:[%s4 + $0x4] sm:$0xf]
  %v129 = vld [vmem:[%s4 + $0x8] sm:$0xf]
  %v130 = vld [vmem:[%s4 + $0xc] sm:$0xf]
  %v131 = vld [vmem:[%s4 + $0x10] sm:$0xf]
  %v132 = vld [vmem:[%s4 + $0x14] sm:$0xf]
  %v133 = vld [vmem:[%s4 + $0x18] sm:$0xf]
  %v134 = vld [vmem:[%s4 + $0x1c] sm:$0xf]
  %v135 = vld [vmem:[%s4 + $0x20] sm:$0xf]
  %v136 = vld [vmem:[%s4 + $0x24] sm:$0xf]
  %v137 = vld [vmem:[%s4 + $0x28] sm:$0xf]
  %v138 = vld [vmem:[%s4 + $0x2c] sm:$0xf]
  %v139 = vld [vmem:[%s4 + $0x30] sm:$0xf]
  %v140 = vld [vmem:[%s4 + $0x34] sm:$0xf]
  %v141 = vld [vmem:[%s4 + $0x38] sm:$0xf]
  %v142 = vld [vmem:[%s4 + $0x3c] sm:$0xf]
  %v159 = vunpack.c.l.b16 %v127
  %v160 = vunpack.c.l.b16 %v128
  %v161 = vunpack.c.l.b16 %v129
  %v162 = vunpack.c.l.b16 %v130
  %v163 = vunpack.c.l.b16 %v131
  %v164 = vunpack.c.l.b16 %v132
  %v165 = vunpack.c.l.b16 %v133
  %v166 = vunpack.c.l.b16 %v134
  %v167 = vunpack.c.l.b16 %v135
  %v168 = vunpack.c.l.b16 %v136
  %v169 = vunpack.c.l.b16 %v137
  %v170 = vunpack.c.l.b16 %v138
  %v171 = vunpack.c.l.b16 %v139
  %v172 = vunpack.c.l.b16 %v140
  %v173 = vunpack.c.l.b16 %v141
  %v174 = vunpack.c.l.b16 %v142
  %v175 = vpack.c.b16 %v160, %v159
  %v176 = vpack.c.b16 %v162, %v161
  %v177 = vpack.c.b16 %v164, %v163
  %v178 = vpack.c.b16 %v166, %v165
  %v179 = vpack.c.b16 %v168, %v167
  %v180 = vpack.c.b16 %v170, %v169
  %v181 = vpack.c.b16 %v172, %v171
  %v182 = vpack.c.b16 %v174, %v173
  %191 = vmatpush.bf16.msra.mxu0 %v182
  %192 = vmatpush.bf16.msra.mxu0 %v181
  %193 = vmatpush.bf16.msra.mxu0 %v180
  %194 = vmatpush.bf16.msra.mxu0 %v179
  %195 = vmatpush.bf16.msra.mxu0 %v178
  %196 = vmatpush.bf16.msra.mxu0 %v177
  %197 = vmatpush.bf16.msra.mxu0 %v176
  %198 = vmatpush.bf16.msra.mxu0 %v175
  %199 = vmatmul.bf16.gmra.mxu0 %v90
  %v200 = vpop.f32.mrf.mxu0
  %v201 = vadd.f32 0.0, %v200
  %v202 = vpop.f32.mrf.mxu0
  %v203 = vadd.f32 0.0, %v202
  %204 = vdwg.mxu0
  %v221 = vunpack.c.l.b16 %v111
  %v222 = vunpack.c.l.b16 %v112
  %v223 = vunpack.c.l.b16 %v113
  %v224 = vunpack.c.l.b16 %v114
  %v225 = vunpack.c.l.b16 %v115
  %v226 = vunpack.c.l.b16 %v116
  %v227 = vunpack.c.l.b16 %v117
  %v228 = vunpack.c.l.b16 %v118
  %v229 = vunpack.c.l.b16 %v119
  %v230 = vunpack.c.l.b16 %v120
  %v231 = vunpack.c.l.b16 %v121
  %v232 = vunpack.c.l.b16 %v122
  %v233 = vunpack.c.l.b16 %v123
  %v234 = vunpack.c.l.b16 %v124
  %v235 = vunpack.c.l.b16 %v125
  %v236 = vunpack.c.l.b16 %v126
  %v237 = vpack.c.b16 %v222, %v221
  %v238 = vpack.c.b16 %v224, %v223
  %v239 = vpack.c.b16 %v226, %v225
  %v240 = vpack.c.b16 %v228, %v227
  %v241 = vpack.c.b16 %v230, %v229
  %v242 = vpack.c.b16 %v232, %v231
  %v243 = vpack.c.b16 %v234, %v233
  %v244 = vpack.c.b16 %v236, %v235
  %253 = vmatpush.bf16.msra.mxu0 %v244
  %254 = vmatpush.bf16.msra.mxu0 %v243
  %255 = vmatpush.bf16.msra.mxu0 %v242
  %256 = vmatpush.bf16.msra.mxu0 %v241
  %257 = vmatpush.bf16.msra.mxu0 %v240
  %258 = vmatpush.bf16.msra.mxu0 %v239
  %259 = vmatpush.bf16.msra.mxu0 %v238
  %260 = vmatpush.bf16.msra.mxu0 %v237
  %261 = vmatmul.bf16.gmra.mxu0 %v110
  %v262 = vpop.f32.mrf.mxu0
  %v263 = vadd.f32 %v201, %v262
  %v264 = vpop.f32.mrf.mxu0
  %v265 = vadd.f32 %v203, %v264
  %266 = vdwg.mxu0
  %v267 = vld [vmem:[%s5] sm:$0x1]
  %v269 = vperm.slane %v267, 0
  %v271 = vadd.f32 %v263, %v269
  %v272 = vadd.f32 %v265, %v269
  %v273 = vpack.c.bf16 %v271, %v271
  %v274 = vpack.c.bf16 %v272, %v272
  %v275 = vunpack.c.l.bf16 %v273
  %v276 = vunpack.c.l.bf16 %v274
  %v277 = vunpack.c.l.bf16 %v75
  %v278 = vunpack.c.l.bf16 %v76
  %v279 = vmul.f32 %v275, %v277
  %v280 = vmul.f32 %v276, %v278
  %v281 = vpack.c.bf16 %v280, %v279
  %282 = vmatpush.bf16.msra.mxu0 0
  %283 = vmatpush.bf16.msra.mxu0 0
  %284 = vmatpush.bf16.msra.mxu0 0
  %285 = vmatpush.bf16.msra.mxu0 0
  %286 = vmatpush.bf16.msra.mxu0 0
  %287 = vmatpush.bf16.msra.mxu0 0
  %288 = vmatpush.bf16.msra.mxu0 0
  %289 = vmatpush.bf16.msra.mxu0 %v281
  %290 = vmatmul.bf16.gmra.mxu0 %v94
  %v291 = vpop.f32.mrf.mxu0
  %v292 = vadd.f32 0.0, %v291
  %v293 = vpop.f32.mrf.mxu0
  %v294 = vadd.f32 0.0, %v293
  %295 = vdwg.mxu0
  %v296 = vpack.c.bf16 %v294, %v292
  %v297 = vld [vmem:[%s6] sm:$0xf]
  %v298 = vld [vmem:[%s6 + $0x4] sm:$0xf]
  %v299 = vld [vmem:[%s6 + $0x8] sm:$0xf]
  %v300 = vld [vmem:[%s6 + $0xc] sm:$0xf]
  %v301 = vld [vmem:[%s6 + $0x10] sm:$0xf]
  %v302 = vld [vmem:[%s6 + $0x14] sm:$0xf]
  %v303 = vld [vmem:[%s6 + $0x18] sm:$0xf]
  %v304 = vld [vmem:[%s6 + $0x1c] sm:$0xf]
  %v305 = vld [vmem:[%s6 + $0x20] sm:$0xf]
  %v306 = vld [vmem:[%s6 + $0x24] sm:$0xf]
  %v307 = vld [vmem:[%s6 + $0x28] sm:$0xf]
  %v308 = vld [vmem:[%s6 + $0x2c] sm:$0xf]
  %v309 = vld [vmem:[%s6 + $0x30] sm:$0xf]
  %v310 = vld [vmem:[%s6 + $0x34] sm:$0xf]
  %v311 = vld [vmem:[%s6 + $0x38] sm:$0xf]
  %v312 = vld [vmem:[%s6 + $0x3c] sm:$0xf]
  %v313 = vld [vmem:[%s7] sm:$0xf]
  %v314 = vld [vmem:[%s7 + $0x4] sm:$0xf]
  %v315 = vld [vmem:[%s7 + $0x8] sm:$0xf]
  %v316 = vld [vmem:[%s7 + $0xc] sm:$0xf]
  %v317 = vld [vmem:[%s7 + $0x10] sm:$0xf]
  %v318 = vld [vmem:[%s7 + $0x14] sm:$0xf]
  %v319 = vld [vmem:[%s7 + $0x18] sm:$0xf]
  %v320 = vld [vmem:[%s7 + $0x1c] sm:$0xf]
  %v321 = vld [vmem:[%s7 + $0x20] sm:$0xf]
  %v322 = vld [vmem:[%s7 + $0x24] sm:$0xf]
  %v323 = vld [vmem:[%s7 + $0x28] sm:$0xf]
  %v324 = vld [vmem:[%s7 + $0x2c] sm:$0xf]
  %v325 = vld [vmem:[%s7 + $0x30] sm:$0xf]
  %v326 = vld [vmem:[%s7 + $0x34] sm:$0xf]
  %v327 = vld [vmem:[%s7 + $0x38] sm:$0xf]
  %v328 = vld [vmem:[%s7 + $0x3c] sm:$0xf]
  %v345 = vunpack.c.l.b16 %v313
  %v346 = vunpack.c.l.b16 %v314
  %v347 = vunpack.c.l.b16 %v315
  %v348 = vunpack.c.l.b16 %v316
  %v349 = vunpack.c.l.b16 %v317
  %v350 = vunpack.c.l.b16 %v318
  %v351 = vunpack.c.l.b16 %v319
  %v352 = vunpack.c.l.b16 %v320
  %v353 = vunpack.c.l.b16 %v321
  %v354 = vunpack.c.l.b16 %v322
  %v355 = vunpack.c.l.b16 %v323
  %v356 = vunpack.c.l.b16 %v324
  %v357 = vunpack.c.l.b16 %v325
  %v358 = vunpack.c.l.b16 %v326
  %v359 = vunpack.c.l.b16 %v327
  %v360 = vunpack.c.l.b16 %v328
  %v361 = vpack.c.b16 %v346, %v345
  %v362 = vpack.c.b16 %v348, %v347
  %v363 = vpack.c.b16 %v350, %v349
  %v364 = vpack.c.b16 %v352, %v351
  %v365 = vpack.c.b16 %v354, %v353
  %v366 = vpack.c.b16 %v356, %v355
  %v367 = vpack.c.b16 %v358, %v357
  %v368 = vpack.c.b16 %v360, %v359
  %377 = vmatpush.bf16.msra.mxu0 %v368
  %378 = vmatpush.bf16.msra.mxu0 %v367
  %379 = vmatpush.bf16.msra.mxu0 %v366
  %380 = vmatpush.bf16.msra.mxu0 %v365
  %381 = vmatpush.bf16.msra.mxu0 %v364
  %382 = vmatpush.bf16.msra.mxu0 %v363
  %383 = vmatpush.bf16.msra.mxu0 %v362
  %384 = vmatpush.bf16.msra.mxu0 %v361
  %385 = vmatmul.bf16.gmra.mxu0 %v281
  %v386 = vpop.f32.mrf.mxu0
  %v387 = vadd.f32 0.0, %v386
  %v388 = vpop.f32.mrf.mxu0
  %v389 = vadd.f32 0.0, %v388
  %390 = vdwg.mxu0
  %v407 = vunpack.c.l.b16 %v297
  %v408 = vunpack.c.l.b16 %v298
  %v409 = vunpack.c.l.b16 %v299
  %v410 = vunpack.c.l.b16 %v300
  %v411 = vunpack.c.l.b16 %v301
  %v412 = vunpack.c.l.b16 %v302
  %v413 = vunpack.c.l.b16 %v303
  %v414 = vunpack.c.l.b16 %v304
  %v415 = vunpack.c.l.b16 %v305
  %v416 = vunpack.c.l.b16 %v306
  %v417 = vunpack.c.l.b16 %v307
  %v418 = vunpack.c.l.b16 %v308
  %v419 = vunpack.c.l.b16 %v309
  %v420 = vunpack.c.l.b16 %v310
  %v421 = vunpack.c.l.b16 %v311
  %v422 = vunpack.c.l.b16 %v312
  %v423 = vpack.c.b16 %v408, %v407
  %v424 = vpack.c.b16 %v410, %v409
  %v425 = vpack.c.b16 %v412, %v411
  %v426 = vpack.c.b16 %v414, %v413
  %v427 = vpack.c.b16 %v416, %v415
  %v428 = vpack.c.b16 %v418, %v417
  %v429 = vpack.c.b16 %v420, %v419
  %v430 = vpack.c.b16 %v422, %v421
  %439 = vmatpush.bf16.msra.mxu0 %v430
  %440 = vmatpush.bf16.msra.mxu0 %v429
  %441 = vmatpush.bf16.msra.mxu0 %v428
  %442 = vmatpush.bf16.msra.mxu0 %v427
  %443 = vmatpush.bf16.msra.mxu0 %v426
  %444 = vmatpush.bf16.msra.mxu0 %v425
  %445 = vmatpush.bf16.msra.mxu0 %v424
  %446 = vmatpush.bf16.msra.mxu0 %v423
  %447 = vmatmul.bf16.gmra.mxu0 %v296
  %v448 = vpop.f32.mrf.mxu0
  %v449 = vadd.f32 %v387, %v448
  %v450 = vpop.f32.mrf.mxu0
  %v451 = vadd.f32 %v389, %v450
  %452 = vdwg.mxu0
  %v453 = vld [vmem:[%s8] sm:$0x1]
  %v455 = vperm.slane %v453, 0
  %v457 = vadd.f32 %v449, %v455
  %v458 = vadd.f32 %v451, %v455
  %v459 = vpack.c.bf16 %v457, %v457
  %v460 = vpack.c.bf16 %v458, %v458
  %v461 = vunpack.c.l.bf16 %v459
  %v462 = vunpack.c.l.bf16 %v460
  %v463 = vmul.f32 %v461, %v277
  %v464 = vmul.f32 %v462, %v278
  %v465 = vpack.c.bf16 %v464, %v463
  %466 = vmatpush.bf16.msra.mxu0 0
  %467 = vmatpush.bf16.msra.mxu0 0
  %468 = vmatpush.bf16.msra.mxu0 0
  %469 = vmatpush.bf16.msra.mxu0 0
  %470 = vmatpush.bf16.msra.mxu0 0
  %471 = vmatpush.bf16.msra.mxu0 0
  %472 = vmatpush.bf16.msra.mxu0 0
  %473 = vmatpush.bf16.msra.mxu0 %v465
  %474 = vmatmul.bf16.gmra.mxu0 %v94
  %v475 = vpop.f32.mrf.mxu0
  %v476 = vadd.f32 0.0, %v475
  %v477 = vpop.f32.mrf.mxu0
  %v478 = vadd.f32 0.0, %v477
  %479 = vdwg.mxu0
  %v480 = vpack.c.bf16 %v478, %v476
  %v481 = vld [vmem:[%s9] sm:$0xf]
  %v482 = vld [vmem:[%s9 + $0x4] sm:$0xf]
  %v483 = vld [vmem:[%s9 + $0x8] sm:$0xf]
  %v484 = vld [vmem:[%s9 + $0xc] sm:$0xf]
  %v485 = vld [vmem:[%s9 + $0x10] sm:$0xf]
  %v486 = vld [vmem:[%s9 + $0x14] sm:$0xf]
  %v487 = vld [vmem:[%s9 + $0x18] sm:$0xf]
  %v488 = vld [vmem:[%s9 + $0x1c] sm:$0xf]
  %v489 = vld [vmem:[%s9 + $0x20] sm:$0xf]
  %v490 = vld [vmem:[%s9 + $0x24] sm:$0xf]
  %v491 = vld [vmem:[%s9 + $0x28] sm:$0xf]
  %v492 = vld [vmem:[%s9 + $0x2c] sm:$0xf]
  %v493 = vld [vmem:[%s9 + $0x30] sm:$0xf]
  %v494 = vld [vmem:[%s9 + $0x34] sm:$0xf]
  %v495 = vld [vmem:[%s9 + $0x38] sm:$0xf]
  %v496 = vld [vmem:[%s9 + $0x3c] sm:$0xf]
  %v497 = vld [vmem:[%s10] sm:$0xf]
  %v498 = vld [vmem:[%s10 + $0x4] sm:$0xf]
  %v499 = vld [vmem:[%s10 + $0x8] sm:$0xf]
  %v500 = vld [vmem:[%s10 + $0xc] sm:$0xf]
  %v501 = vld [vmem:[%s10 + $0x10] sm:$0xf]
  %v502 = vld [vmem:[%s10 + $0x14] sm:$0xf]
  %v503 = vld [vmem:[%s10 + $0x18] sm:$0xf]
  %v504 = vld [vmem:[%s10 + $0x1c] sm:$0xf]
  %v505 = vld [vmem:[%s10 + $0x20] sm:$0xf]
  %v506 = vld [vmem:[%s10 + $0x24] sm:$0xf]
  %v507 = vld [vmem:[%s10 + $0x28] sm:$0xf]
  %v508 = vld [vmem:[%s10 + $0x2c] sm:$0xf]
  %v509 = vld [vmem:[%s10 + $0x30] sm:$0xf]
  %v510 = vld [vmem:[%s10 + $0x34] sm:$0xf]
  %v511 = vld [vmem:[%s10 + $0x38] sm:$0xf]
  %v512 = vld [vmem:[%s10 + $0x3c] sm:$0xf]
  %v529 = vunpack.c.l.b16 %v497
  %v530 = vunpack.c.l.b16 %v498
  %v531 = vunpack.c.l.b16 %v499
  %v532 = vunpack.c.l.b16 %v500
  %v533 = vunpack.c.l.b16 %v501
  %v534 = vunpack.c.l.b16 %v502
  %v535 = vunpack.c.l.b16 %v503
  %v536 = vunpack.c.l.b16 %v504
  %v537 = vunpack.c.l.b16 %v505
  %v538 = vunpack.c.l.b16 %v506
  %v539 = vunpack.c.l.b16 %v507
  %v540 = vunpack.c.l.b16 %v508
  %v541 = vunpack.c.l.b16 %v509
  %v542 = vunpack.c.l.b16 %v510
  %v543 = vunpack.c.l.b16 %v511
  %v544 = vunpack.c.l.b16 %v512
  %v545 = vpack.c.b16 %v530, %v529
  %v546 = vpack.c.b16 %v532, %v531
  %v547 = vpack.c.b16 %v534, %v533
  %v548 = vpack.c.b16 %v536, %v535
  %v549 = vpack.c.b16 %v538, %v537
  %v550 = vpack.c.b16 %v540, %v539
  %v551 = vpack.c.b16 %v542, %v541
  %v552 = vpack.c.b16 %v544, %v543
  %561 = vmatpush.bf16.msra.mxu0 %v552
  %562 = vmatpush.bf16.msra.mxu0 %v551
  %563 = vmatpush.bf16.msra.mxu0 %v550
  %564 = vmatpush.bf16.msra.mxu0 %v549
  %565 = vmatpush.bf16.msra.mxu0 %v548
  %566 = vmatpush.bf16.msra.mxu0 %v547
  %567 = vmatpush.bf16.msra.mxu0 %v546
  %568 = vmatpush.bf16.msra.mxu0 %v545
  %569 = vmatmul.bf16.gmra.mxu0 %v465
  %v570 = vpop.f32.mrf.mxu0
  %v571 = vadd.f32 0.0, %v570
  %v572 = vpop.f32.mrf.mxu0
  %v573 = vadd.f32 0.0, %v572
  %574 = vdwg.mxu0
  %v591 = vunpack.c.l.b16 %v481
  %v592 = vunpack.c.l.b16 %v482
  %v593 = vunpack.c.l.b16 %v483
  %v594 = vunpack.c.l.b16 %v484
  %v595 = vunpack.c.l.b16 %v485
  %v596 = vunpack.c.l.b16 %v486
  %v597 = vunpack.c.l.b16 %v487
  %v598 = vunpack.c.l.b16 %v488
  %v599 = vunpack.c.l.b16 %v489
  %v600 = vunpack.c.l.b16 %v490
  %v601 = vunpack.c.l.b16 %v491
  %v602 = vunpack.c.l.b16 %v492
  %v603 = vunpack.c.l.b16 %v493
  %v604 = vunpack.c.l.b16 %v494
  %v605 = vunpack.c.l.b16 %v495
  %v606 = vunpack.c.l.b16 %v496
  %v607 = vpack.c.b16 %v592, %v591
  %v608 = vpack.c.b16 %v594, %v593
  %v609 = vpack.c.b16 %v596, %v595
  %v610 = vpack.c.b16 %v598, %v597
  %v611 = vpack.c.b16 %v600, %v599
  %v612 = vpack.c.b16 %v602, %v601
  %v613 = vpack.c.b16 %v604, %v603
  %v614 = vpack.c.b16 %v606, %v605
  %623 = vmatpush.bf16.msra.mxu0 %v614
  %624 = vmatpush.bf16.msra.mxu0 %v613
  %625 = vmatpush.bf16.msra.mxu0 %v612
  %626 = vmatpush.bf16.msra.mxu0 %v611
  %627 = vmatpush.bf16.msra.mxu0 %v610
  %628 = vmatpush.bf16.msra.mxu0 %v609
  %629 = vmatpush.bf16.msra.mxu0 %v608
  %630 = vmatpush.bf16.msra.mxu0 %v607
  %631 = vmatmul.bf16.gmra.mxu0 %v480
  %v632 = vpop.f32.mrf.mxu0
  %v633 = vadd.f32 %v571, %v632
  %v634 = vpop.f32.mrf.mxu0
  %v635 = vadd.f32 %v573, %v634
  %636 = vdwg.mxu0
  %v637 = vld [vmem:[%s11] sm:$0x1]
  %v639 = vperm.slane %v637, 0
  %v641 = vadd.f32 %v633, %v639
  %v642 = vadd.f32 %v635, %v639
  %v643 = vpack.c.bf16 %v641, %v641
  %v644 = vpack.c.bf16 %v642, %v642
  %v645 = vunpack.c.l.bf16 %v643
  %v646 = vunpack.c.l.bf16 %v644
  %v647 = vmul.f32 %v645, %v277
  %v648 = vmul.f32 %v646, %v278
  %v649 = vpack.c.bf16 %v648, %v647
  %v650 = vld [vmem:[%s2] sm:$0xf]
  %v652 = vsel %vm92, %v650, 0
  %654 = vmatpush.bf16.msra.mxu0 0
  %655 = vmatpush.bf16.msra.mxu0 0
  %656 = vmatpush.bf16.msra.mxu0 0
  %657 = vmatpush.bf16.msra.mxu0 0
  %658 = vmatpush.bf16.msra.mxu0 0
  %659 = vmatpush.bf16.msra.mxu0 0
  %660 = vmatpush.bf16.msra.mxu0 0
  %661 = vmatpush.bf16.msra.mxu0 %v649
  %662 = vmatmul.bf16.gmra.mxu0 %v652
  %v663 = vpop.f32.mrf.mxu0
  %v664 = vadd.f32 0.0, %v663
  %v665 = vpop.f32.mrf.mxu0
  %666 = vdwg.mxu0
  %v667 = vld [vmem:[%s12] sm:$0xff]
  %v668 = vld [vmem:[%s12 + $0x8] sm:$0xff]
  %v669 = vld [vmem:[%s12 + $0x10] sm:$0xff]
  %v670 = vld [vmem:[%s12 + $0x18] sm:$0xff]
  %v671 = vld [vmem:[%s12 + $0x20] sm:$0xff]
  %v672 = vld [vmem:[%s12 + $0x28] sm:$0xff]
  %v673 = vld [vmem:[%s12 + $0x30] sm:$0xff]
  %v674 = vld [vmem:[%s12 + $0x38] sm:$0xff]
  %v675 = vld [vmem:[%s12 + $0x40] sm:$0xff]
  %v676 = vld [vmem:[%s12 + $0x48] sm:$0xff]
  %v677 = vld [vmem:[%s12 + $0x50] sm:$0xff]
  %v678 = vld [vmem:[%s12 + $0x58] sm:$0xff]
  %v679 = vld [vmem:[%s12 + $0x60] sm:$0xff]
  %v680 = vld [vmem:[%s12 + $0x68] sm:$0xff]
  %v681 = vld [vmem:[%s12 + $0x70] sm:$0xff]
  %v682 = vld [vmem:[%s12 + $0x78] sm:$0xff]
  %v683 = vld [vmem:[%s13] sm:$0x1]
  %v685 = vperm.slane %v683, 0
  %687 = vmatpush.msra.mxu0 %v682
  %688 = vmatpush.msra.mxu0 %v681
  %689 = vmatpush.msra.mxu0 %v680
  %690 = vmatpush.msra.mxu0 %v679
  %691 = vmatpush.msra.mxu0 %v678
  %692 = vmatpush.msra.mxu0 %v677
  %693 = vmatpush.msra.mxu0 %v676
  %694 = vmatpush.msra.mxu0 %v675
  %695 = vmatpush.msra.mxu0 %v674
  %696 = vmatpush.msra.mxu0 %v673
  %697 = vmatpush.msra.mxu0 %v672
  %698 = vmatpush.msra.mxu0 %v671
  %699 = vmatpush.msra.mxu0 %v670
  %700 = vmatpush.msra.mxu0 %v669
  %701 = vmatpush.msra.mxu0 %v668
  %702 = vmatpush.msra.mxu0 %v667
  %703 = vmatmul.f32.gmra.mxu0 %v664
  %v704 = vpop.f32.mrf.mxu0
  %v705 = vadd.f32 %v685, %v704
  %706 = vdwg.mxu0
  %v707 = vtanh.pop %v705
  %v708 = vld [vmem:[%s14] sm:$0xff]
  %v709 = vld [vmem:[%s14 + $0x8] sm:$0xff]
  %v710 = vld [vmem:[%s14 + $0x10] sm:$0xff]
  %v711 = vld [vmem:[%s14 + $0x18] sm:$0xff]
  %v712 = vld [vmem:[%s14 + $0x20] sm:$0xff]
  %v713 = vld [vmem:[%s14 + $0x28] sm:$0xff]
  %v714 = vld [vmem:[%s14 + $0x30] sm:$0xff]
  %v715 = vld [vmem:[%s14 + $0x38] sm:$0xff]
  %v716 = vld [vmem:[%s14 + $0x40] sm:$0xff]
  %v717 = vld [vmem:[%s14 + $0x48] sm:$0xff]
  %v718 = vld [vmem:[%s14 + $0x50] sm:$0xff]
  %v719 = vld [vmem:[%s14 + $0x58] sm:$0xff]
  %v720 = vld [vmem:[%s14 + $0x60] sm:$0xff]
  %v721 = vld [vmem:[%s14 + $0x68] sm:$0xff]
  %v722 = vld [vmem:[%s14 + $0x70] sm:$0xff]
  %v723 = vld [vmem:[%s14 + $0x78] sm:$0xff]
  %v724 = vld [vmem:[%s15] sm:$0x1]
  %v726 = vperm.slane %v724, 0
  %728 = vmatpush.msra.mxu0 %v723
  %729 = vmatpush.msra.mxu0 %v722
  %730 = vmatpush.msra.mxu0 %v721
  %731 = vmatpush.msra.mxu0 %v720
  %732 = vmatpush.msra.mxu0 %v719
  %733 = vmatpush.msra.mxu0 %v718
  %734 = vmatpush.msra.mxu0 %v717
  %735 = vmatpush.msra.mxu0 %v716
  %736 = vmatpush.msra.mxu0 %v715
  %737 = vmatpush.msra.mxu0 %v714
  %738 = vmatpush.msra.mxu0 %v713
  %739 = vmatpush.msra.mxu0 %v712
  %740 = vmatpush.msra.mxu0 %v711
  %741 = vmatpush.msra.mxu0 %v710
  %742 = vmatpush.msra.mxu0 %v709
  %743 = vmatpush.msra.mxu0 %v708
  %744 = vmatmul.f32.gmra.mxu0 %v707
  %v745 = vpop.f32.mrf.mxu0
  %v746 = vadd.f32 %v726, %v745
  %747 = vdwg.mxu0
  %v748 = vtanh.pop %v746
  %v749 = vld [vmem:[%s16] sm:$0xff]
  %v750 = vld [vmem:[%s16 + $0x8] sm:$0xff]
  %v751 = vld [vmem:[%s16 + $0x10] sm:$0xff]
  %v752 = vld [vmem:[%s16 + $0x18] sm:$0xff]
  %v753 = vld [vmem:[%s16 + $0x20] sm:$0xff]
  %v754 = vld [vmem:[%s16 + $0x28] sm:$0xff]
  %v755 = vld [vmem:[%s16 + $0x30] sm:$0xff]
  %v756 = vld [vmem:[%s16 + $0x38] sm:$0xff]
  %v757 = vld [vmem:[%s16 + $0x40] sm:$0xff]
  %v758 = vld [vmem:[%s16 + $0x48] sm:$0xff]
  %v759 = vld [vmem:[%s16 + $0x50] sm:$0xff]
  %v760 = vld [vmem:[%s16 + $0x58] sm:$0xff]
  %v761 = vld [vmem:[%s16 + $0x60] sm:$0xff]
  %v762 = vld [vmem:[%s16 + $0x68] sm:$0xff]
  %v763 = vld [vmem:[%s16 + $0x70] sm:$0xff]
  %v764 = vld [vmem:[%s16 + $0x78] sm:$0xff]
  %v765 = vld [vmem:[%s17] sm:$0x1]
  %v767 = vperm.slane %v765, 0
  %769 = vmatpush.msra.mxu0 %v764
  %770 = vmatpush.msra.mxu0 %v763
  %771 = vmatpush.msra.mxu0 %v762
  %772 = vmatpush.msra.mxu0 %v761
  %773 = vmatpush.msra.mxu0 %v760
  %774 = vmatpush.msra.mxu0 %v759
  %775 = vmatpush.msra.mxu0 %v758
  %776 = vmatpush.msra.mxu0 %v757
  %777 = vmatpush.msra.mxu0 %v756
  %778 = vmatpush.msra.mxu0 %v755
  %779 = vmatpush.msra.mxu0 %v754
  %780 = vmatpush.msra.mxu0 %v753
  %781 = vmatpush.msra.mxu0 %v752
  %782 = vmatpush.msra.mxu0 %v751
  %783 = vmatpush.msra.mxu0 %v750
  %784 = vmatpush.msra.mxu0 %v749
  %785 = vmatmul.f32.gmra.mxu0 %v748
  %v786 = vpop.f32.mrf.mxu0
  %v787 = vadd.f32 %v767, %v786
  %788 = vdwg.mxu0
  %v789 = vtanh.pop %v787
  %v790 = vld [vmem:[%s18] sm:$0xff]
  %v791 = vld [vmem:[%s18 + $0x8] sm:$0xff]
  %v792 = vld [vmem:[%s18 + $0x10] sm:$0xff]
  %v793 = vld [vmem:[%s18 + $0x18] sm:$0xff]
  %v794 = vld [vmem:[%s18 + $0x20] sm:$0xff]
  %v795 = vld [vmem:[%s18 + $0x28] sm:$0xff]
  %v796 = vld [vmem:[%s18 + $0x30] sm:$0xff]
  %v797 = vld [vmem:[%s18 + $0x38] sm:$0xff]
  %v798 = vld [vmem:[%s18 + $0x40] sm:$0xff]
  %v799 = vld [vmem:[%s18 + $0x48] sm:$0xff]
  %v800 = vld [vmem:[%s18 + $0x50] sm:$0xff]
  %v801 = vld [vmem:[%s18 + $0x58] sm:$0xff]
  %v802 = vld [vmem:[%s18 + $0x60] sm:$0xff]
  %v803 = vld [vmem:[%s18 + $0x68] sm:$0xff]
  %v804 = vld [vmem:[%s18 + $0x70] sm:$0xff]
  %v805 = vld [vmem:[%s18 + $0x78] sm:$0xff]
  %v806 = vld [vmem:[%s19] sm:$0x1]
  %v808 = vperm.slane %v806, 0
  %810 = vmatpush.msra.mxu0 %v805
  %811 = vmatpush.msra.mxu0 %v804
  %812 = vmatpush.msra.mxu0 %v803
  %813 = vmatpush.msra.mxu0 %v802
  %814 = vmatpush.msra.mxu0 %v801
  %815 = vmatpush.msra.mxu0 %v800
  %816 = vmatpush.msra.mxu0 %v799
  %817 = vmatpush.msra.mxu0 %v798
  %818 = vmatpush.msra.mxu0 %v797
  %819 = vmatpush.msra.mxu0 %v796
  %820 = vmatpush.msra.mxu0 %v795
  %821 = vmatpush.msra.mxu0 %v794
  %822 = vmatpush.msra.mxu0 %v793
  %823 = vmatpush.msra.mxu0 %v792
  %824 = vmatpush.msra.mxu0 %v791
  %825 = vmatpush.msra.mxu0 %v790
  %826 = vmatmul.f32.gmra.mxu0 %v789
  %v827 = vpop.f32.mrf.mxu0
  %v828 = vadd.f32 %v808, %v827
  %829 = vdwg.mxu0
  %830 = vst [vmem:[%s20] sm:$0xff] %v828
  // Predicated region
  $region82: #{mlp_forward.1} parent=0 // pred_check
    _
  $region83: #{mlp_forward.1} parent=0 // pred_check_branch
    %832 = sbr.rel (0) target = $region85
  $region84: #{mlp_forward.1} parent=0 // pred_region
    _
  $region85: #{mlp_forward.1} parent=0 // pred_fallthru
    _
  // Predicated region
  $region86: #{mlp_forward.1} parent=0 // pred_check
    _
  $region87: #{mlp_forward.1} parent=0 // pred_check_branch
    %834 = sbr.rel (0) target = $region89
  $region88: #{mlp_forward.1} parent=0 // pred_region
    _
  $region89: #{mlp_forward.1} parent=0 // pred_fallthru
    _

</llo_original>
